<compile_context>
chip_gen: v5e
topology: v5e:2x2
jax: 0.10.0
libtpu: 0.0.40
codegen_flags: <defaults>
</compile_context>

<pallas_src>
import math
from functools import lru_cache, partial

import jax
import jax.numpy as jnp
from jax import lax
from jax.experimental import pallas as pl
from jax.experimental.pallas import tpu as pltpu

_SELU_ALPHA = 1.6732632423543772   # matches torch.nn.SELU
_SELU_SCALE = 1.0507009873554805
_BN_EPS = 1e-5

# Matmul operand dtype.  f32 keeps the module's numerics exactly; at these tiny
# contractions (K <= 48, Cout <= 16) the matmuls are MXU-latency-bound, not
# throughput-bound, so bf16 operands buy nothing measurable here.  Flip to
# jnp.bfloat16 (f32 accumulation stays) for large-C production shapes.
_MXU_DTYPE = jnp.float32


def _round_up(v, m):
    return (v + m - 1) // m * m


# ----------------------------------------------------------------------------
# Lane-shift helper + one-time rotate-convention probe
# ----------------------------------------------------------------------------
def _make_shift_fn(mode, n):
    """Returns f(v, s) with out[:, m] = v[:, (m + s) % n] for static s.
    Wrapped values always land in masked taps or in flat positions the wrapper
    never reads, so cyclic wrap is safe."""
    if mode == "pltpu_roll":            # pltpu.roll follows jnp.roll convention
        def f(v, s):
            s = (-s) % n
            return pltpu.roll(v, s, axis=1) if s else v
    elif mode == "pltpu_roll_inv":      # opposite rotation convention
        def f(v, s):
            s = s % n
            return pltpu.roll(v, s, axis=1) if s else v
    else:                               # "slice": concat of two static lane slices
        def f(v, s):
            s = s % n
            if s == 0:
                return v
            return jnp.concatenate([v[:, s:], v[:, :s]], axis=1)
    return f


@lru_cache(maxsize=None)
def _probe_roll_mode(n):
    """One-off tiny kernel that pins pltpu.roll's rotation direction (and that
    multi-vreg lane rotates lower for this width).  Falls back to the
    guaranteed-correct slice-based shift if roll is unusable."""
    try:
        def k(x_ref, o_ref):
            x = x_ref[...]
            o_ref[...] = pltpu.roll(x, 1, axis=1) + pltpu.roll(x, n - 3, axis=1)

        vm = pl.BlockSpec(memory_space=pltpu.MemorySpace.VMEM)
        x = jnp.tile(jnp.arange(n, dtype=jnp.float32)[None, :], (8, 1))
        out = pl.pallas_call(k, out_shape=jax.ShapeDtypeStruct((8, n), jnp.float32),
                             in_specs=[vm], out_specs=vm)(x)
        row = jax.device_get(out[0]).astype(int)
        idx = jax.device_get(jnp.arange(n))
        as_jnp = ((idx - 1) % n) + ((idx + 3) % n)   # jnp.roll convention
        as_inv = ((idx + 1) % n) + ((idx - 3) % n)   # inverted convention
        if (row == as_jnp).all():
            return "pltpu_roll"
        if (row == as_inv).all():
            return "pltpu_roll_inv"
    except Exception:
        pass
    return "slice"


# ----------------------------------------------------------------------------
# Kernel
# ----------------------------------------------------------------------------
def _make_kernel(*, W, Mp, C1p, nvalid, downsample, shift_mode):
    shift = _make_shift_fn(shift_mode, Mp)
    f32 = jnp.float32
    dn = (((1,), (0,)), ((), ()))          # plain (Cout, K) @ (K, M) matmul

    def mm(w_ref, patch, bias_ref):
        out = lax.dot_general(w_ref[...].astype(_MXU_DTYPE),
                              patch.astype(_MXU_DTYPE),
                              dn, preferred_element_type=f32)
        return out + bias_ref[...]

    def kernel(xp_ref, wf_ref, bf_ref, g2_ref, be2_ref, w2_ref, b2_ref,
               wdp_ref, bdp_ref, masks_ref, out_ref):
        masks = masks_ref[...]
        m_l, m_r1, m_r2, m_r3, m_bn = (masks[i:i + 1, :] for i in range(5))

        def patch(v, taps):
            # in-register im2col: stack lane-shifted (masked) copies along sublanes
            return jnp.concatenate(
                [shift(v, s) if m is None else shift(v, s) * m for s, m in taps],
                axis=0)

        k3 = lambda base: [(base - 1, m_l), (base, None), (base + 1, m_r1)]

        # ---- conv1 (+ conv_downsample fused into the same matmul) ------------
        xp = xp_ref[...]
        p1 = patch(xp, k3(0) + k3(W))                              # (6*C0p, Mp)
        first = mm(wf_ref, p1, bf_ref)
        a1 = first[:C1p]                                           # conv1 output
        idn = first[C1p:] if downsample else shift(xp, W)[:C1p]    # identity path

        # ---- bn2: training-mode batch stats over the N*(H+1)*W valid outputs -
        inv = 1.0 / float(nvalid)
        a1m = a1 * m_bn
        mean = jnp.sum(a1m, axis=1, keepdims=True) * inv
        var = jnp.maximum(jnp.sum(a1m * a1, axis=1, keepdims=True) * inv
                          - mean * mean, 0.0)
        scale = g2_ref[...] * lax.rsqrt(var + _BN_EPS)
        h = a1 * scale + (be2_ref[...] - mean * scale)

        # ---- SELU (exp clamped so the dead branch never overflows) -----------
        h = _SELU_SCALE * jnp.where(
            h > 0, h, _SELU_ALPHA * (jnp.exp(jnp.minimum(h, 0.0)) - 1.0))

        # ---- conv2 ------------------------------------------------------------
        o2 = mm(w2_ref, patch(h, k3(0) + k3(W)), b2_ref)

        # ---- residual add + dp (unstrided; stride-3 gather happens in XLA) ---
        res = o2 + idn
        p3 = patch(res, [(-1, m_l), (0, None), (1, m_r1), (2, m_r2), (3, m_r3)])
        out_ref[...] = mm(wdp_ref, p3, bdp_ref)        # single lane-dense store

    return kernel


# ----------------------------------------------------------------------------
# Wrapper
# ----------------------------------------------------------------------------
@partial(jax.jit, static_argnames=('nb_filts', 'first', 'shift_mode'))
def _forward_jit(x_nchw, params, nb_filts, first, shift_mode):
    del first  # bn1/SELU branch output is discarded by the original forward.
    c0, c1 = nb_filts
    N, C, H, W = x_nchw.shape
    assert C == c0
    f32 = jnp.float32
    C0p, C1p = _round_up(c0, 8), _round_up(c1, 8)
    S = (H + 2) * W                  # per-sample flat stride (H rows + top/bottom pad)
    M = N * S
    Mp = _round_up(M, 128)           # lane-dense (128-aligned) flat width
    Wout = (W + 2 - 5) // 3 + 1      # dp: kernel 5, pad 1, stride 3
    downsample = (c0 != c1)

    # -- raw input in channel-major flat layout: the only large kernel DMA -----
    xp = jnp.pad(x_nchw.astype(f32), ((0, 0), (0, 0), (1, 1), (0, 0)))
    xp = jnp.transpose(xp, (1, 0, 2, 3)).reshape(c0, M)
    xp = jnp.pad(xp, ((0, C0p - c0), (0, Mp - M)))                 # (C0p, Mp)

    # -- weights as (Cout, K) matrices, tap-major / channel-minor, zero-padded -
    def wk(w, cin_pad):
        co, ci, kh, kw = w.shape
        w = jnp.transpose(jnp.asarray(w, f32), (0, 2, 3, 1))
        w = jnp.pad(w, ((0, 0), (0, 0), (0, 0), (0, cin_pad - ci)))
        return w.reshape(co, kh * kw * cin_pad)

    def rows(a, r):
        return jnp.pad(a, ((0, r - a.shape[0]),) + ((0, 0),) * (a.ndim - 1))

    def colv(v):
        return rows(jnp.asarray(v, f32).reshape(-1, 1), C1p)

    w1k = rows(wk(params['conv1_w'], C0p), C1p)                    # (C1p, 6*C0p)
    b1 = colv(params['conv1_b'])
    if downsample:
        wdk = wk(params['down_w'], C0p)                            # taps (dh=1, dw)
        wdk = jnp.concatenate([jnp.zeros_like(wdk), wdk], axis=1)  # dh=0 block zeroed
        w_first = jnp.concatenate([w1k, rows(wdk, C1p)], axis=0)   # (2*C1p, 6*C0p)
        b_first = jnp.concatenate([b1, colv(params['down_b'])], axis=0)
    else:
        w_first, b_first = w1k, b1
    w2k, b2 = rows(wk(params['conv2_w'], C1p), C1p), colv(params['conv2_b'])
    wdpk, bdp = rows(wk(params['dp_w'], C1p), C1p), colv(params['dp_b'])
    g2, be2 = colv(params['bn2_g']), colv(params['bn2_b'])

    # -- W-boundary + bn-validity masks over the flat axis (tiny, precomputed) -
    pos = jnp.arange(Mp)
    xc = pos % W
    bn_ok = (pos < M) & ((pos % S) < (H + 1) * W)
    zero = jnp.zeros_like(bn_ok)
    masks = jnp.stack([xc >= 1, xc <= W - 2, xc <= W - 3, xc <= W - 4,
                       bn_ok, zero, zero, zero]).astype(f32)       # (8, Mp)

    args = (xp, w_first, b_first, g2, be2, w2k, b2, wdpk, bdp, masks)
    r_first = 2 * C1p if downsample else C1p
    flops = 2 * Mp * (r_first * 6 * C0p + C1p * 6 * C1p + C1p * 5 * C1p)
    cost = pl.CostEstimate(flops=flops, transcendentals=C1p * Mp + C1p,
                           bytes_accessed=4 * (sum(int(a.size) for a in args)
                                               + C1p * Mp))

    vm = pl.BlockSpec(memory_space=pltpu.MemorySpace.VMEM)
    # Single grid point: the whole working set is a few hundred KB and bn2's
    # batch statistics couple every sample; nothing to pipeline at this size
    # and no generation-specific VMEM ceiling to manage (no vmem_limit needed).
    # TODO(synk): production sizes -> grid over flat-spatial tiles ("parallel"
    # for v7x megacore) + two-pass / cross-block-accumulator bn2.
    out_flat = pl.pallas_call(
        _make_kernel(W=W, Mp=Mp, C1p=C1p, nvalid=N * (H + 1) * W,
                     downsample=downsample, shift_mode=shift_mode),
        out_shape=jax.ShapeDtypeStruct((C1p, Mp), f32),
        in_specs=[vm] * len(args),
        out_specs=vm,
        cost_estimate=cost,
    )(*args)

    # stride-3 column gather + valid-row crop as plain XLA slicing (linear cost)
    u = out_flat[:c1, :M].reshape(c1, N, H + 2, W)
    u = u[:, :, :H, :3 * (Wout - 1) + 1:3]                         # (c1, N, H, Wout)
    return jnp.transpose(u, (1, 0, 2, 3))                          # NCHW


def residual_block_forward(x_nchw, params, nb_filts, first=False):
    """x_nchw: (N, C0, H, W) float32.  Returns (N, C1, H, Wout), like PyTorch."""
    N, _, H, W = x_nchw.shape
    Mp = _round_up(N * (H + 2) * W, 128)
    shift_mode = _probe_roll_mode(Mp)
    return _forward_jit(x_nchw, params, tuple(int(v) for v in nb_filts),
                        bool(first), shift_mode)


# ----------------------------------------------------------------------------
# Parameters + pure-JAX reference (for validation)
# ----------------------------------------------------------------------------
def init_params(key, nb_filts):
    """Deterministic parameters matching the nn.Module shapes."""
    c0, c1 = nb_filts
    ks = jax.random.split(key, 10)

    def u(k, shape, fan_in):
        b = 1.0 / math.sqrt(fan_in)
        return jax.random.uniform(k, shape, jnp.float32, -b, b)

    return dict(
        conv1_w=u(ks[0], (c1, c0, 2, 3), c0 * 2 * 3),
        conv1_b=u(ks[1], (c1,), c0 * 2 * 3),
        bn2_g=jnp.ones((c1,), jnp.float32) + 0.1 * jax.random.normal(ks[2], (c1,)),
        bn2_b=0.1 * jax.random.normal(ks[3], (c1,)),
        conv2_w=u(ks[4], (c1, c1, 2, 3), c1 * 2 * 3),
        conv2_b=u(ks[5], (c1,), c1 * 2 * 3),
        down_w=u(ks[6], (c1, c0, 1, 3), c0 * 1 * 3),
        down_b=u(ks[7], (c1,), c0 * 1 * 3),
        dp_w=u(ks[8], (c1, c1, 1, 5), c1 * 1 * 5),
        dp_b=u(ks[9], (c1,), c1 * 1 * 5),
    )


def residual_block_reference(x, p, nb_filts):
    """Pure-JAX/XLA reference with the same semantics."""
    c0, c1 = nb_filts
    dn = ('NCHW', 'OIHW', 'NCHW')

    def conv(v, w, pad, stride=(1, 1)):
        return lax.conv_general_dilated(v, w, stride, pad, dimension_numbers=dn,
                                        precision=lax.Precision.HIGHEST)

    out = conv(x, p['conv1_w'], [(1, 1), (1, 1)]) + p['conv1_b'][None, :, None, None]
    mean = out.mean(axis=(0, 2, 3), keepdims=True)
    var = ((out - mean) ** 2).mean(axis=(0, 2, 3), keepdims=True)
    out = (out - mean) / jnp.sqrt(var + _BN_EPS)
    out = out * p['bn2_g'][None, :, None, None] + p['bn2_b'][None, :, None, None]
    out = jax.nn.selu(out)
    out = conv(out, p['conv2_w'], [(0, 0), (1, 1)]) + p['conv2_b'][None, :, None, None]
    if c0 != c1:
        idn = conv(x, p['down_w'], [(0, 0), (1, 1)]) + p['down_b'][None, :, None, None]
    else:
        idn = x
    out = out + idn
    out = conv(out, p['dp_w'], [(0, 0), (1, 1)], stride=(1, 3)) + p['dp_b'][None, :, None, None]
    return out


if __name__ == "__main__":
    key = jax.random.PRNGKey(0)
    kx1, kp1, kx2, kp2 = jax.random.split(key, 4)

    # ---- downsample path: C0=4 -> C1=8 --------------------------------------
    nb1 = (4, 8)
    x1 = jax.random.normal(kx1, (2, 4, 16, 16), jnp.float32)     # NCHW
    params1 = init_params(kp1, nb1)
    out1 = jax.block_until_ready(residual_block_forward(x1, params1, nb1))
    ref1 = jax.block_until_ready(residual_block_reference(x1, params1, nb1))
    assert out1.shape == ref1.shape == (2, 8, 16, 5), (out1.shape, ref1.shape)
    err1 = float(jnp.max(jnp.abs(out1 - ref1)))
    assert err1 < 2e-2, f"downsample path: max abs error too large: {err1}"

    # ---- identity path: C0 == C1 == 8 (conv_downsample skipped) -------------
    nb2 = (8, 8)
    x2 = jax.random.normal(kx2, (2, 8, 16, 16), jnp.float32)
    params2 = init_params(kp2, nb2)
    out2 = jax.block_until_ready(residual_block_forward(x2, params2, nb2))
    ref2 = jax.block_until_ready(residual_block_reference(x2, params2, nb2))
    assert out2.shape == ref2.shape == (2, 8, 16, 5), (out2.shape, ref2.shape)
    err2 = float(jnp.max(jnp.abs(out2 - ref2)))
    assert err2 < 2e-2, f"identity path: max abs error too large: {err2}"

    print("KERNEL_OK")
</pallas_src>

<mosaic_0001>
module attributes {stable_mosaic.version = 11 : i64} {
  func.func @k(%arg0: memref<8x640xf32, #tpu.memory_space<vmem>>, %arg1: memref<8x640xf32, #tpu.memory_space<vmem>>) attributes {dimension_semantics = [], scalar_prefetch = 0 : i64, scratch_operands = 0 : i64, tpu.core_type = #tpu.core_type<tc>} {
    %c0 = arith.constant 0 : index
    %c0_0 = arith.constant 0 : index
    %0 = vector.load %arg0[%c0, %c0_0] : memref<8x640xf32, #tpu.memory_space<vmem>>, vector<8x640xf32>
    %c1_i32 = arith.constant 1 : i32
    %1 = tpu.dynamic_rotate %0 by %c1_i32 dim 1 : vector<8x640xf32>, i32 -> vector<8x640xf32>
    %c637_i32 = arith.constant 637 : i32
    %2 = tpu.dynamic_rotate %0 by %c637_i32 dim 1 : vector<8x640xf32>, i32 -> vector<8x640xf32>
    %3 = arith.addf %1, %2 : vector<8x640xf32>
    %c0_1 = arith.constant 0 : index
    %c0_2 = arith.constant 0 : index
    %4 = vector.load %arg1[%c0_1, %c0_2] : memref<8x640xf32, #tpu.memory_space<vmem>>, vector<8x640xf32>
    tpu.vector_store %arg1[%c0_1, %c0_2], %3 {strides = array<i32>} : memref<8x640xf32, #tpu.memory_space<vmem>>, vector<8x640xf32>,
    return
  }
}

module attributes {stable_mosaic.version = 11 : i64} {
  func.func @kernel(%arg0: memref<8x640xf32, #tpu.memory_space<vmem>>, %arg1: memref<16x48xf32, #tpu.memory_space<vmem>>, %arg2: memref<16x1xf32, #tpu.memory_space<vmem>>, %arg3: memref<8x1xf32, #tpu.memory_space<vmem>>, %arg4: memref<8x1xf32, #tpu.memory_space<vmem>>, %arg5: memref<8x48xf32, #tpu.memory_space<vmem>>, %arg6: memref<8x1xf32, #tpu.memory_space<vmem>>, %arg7: memref<8x40xf32, #tpu.memory_space<vmem>>, %arg8: memref<8x1xf32, #tpu.memory_space<vmem>>, %arg9: memref<8x640xf32, #tpu.memory_space<vmem>>, %arg10: memref<8x640xf32, #tpu.memory_space<vmem>>) attributes {dimension_semantics = [], scalar_prefetch = 0 : i64, scratch_operands = 0 : i64, tpu.core_type = #tpu.core_type<tc>} {
    %c0 = arith.constant 0 : index
    %c0_0 = arith.constant 0 : index
    %0 = vector.load %arg9[%c0, %c0_0] : memref<8x640xf32, #tpu.memory_space<vmem>>, vector<8x640xf32>
    %1 = vector.extract_strided_slice %0 {offsets = [0, 0], sizes = [1, 640], strides = [1, 1]} : vector<8x640xf32> to vector<1x640xf32>
    %2 = vector.extract_strided_slice %0 {offsets = [1, 0], sizes = [1, 640], strides = [1, 1]} : vector<8x640xf32> to vector<1x640xf32>
    %3 = vector.extract_strided_slice %0 {offsets = [2, 0], sizes = [1, 640], strides = [1, 1]} : vector<8x640xf32> to vector<1x640xf32>
    %4 = vector.extract_strided_slice %0 {offsets = [3, 0], sizes = [1, 640], strides = [1, 1]} : vector<8x640xf32> to vector<1x640xf32>
    %5 = vector.extract_strided_slice %0 {offsets = [4, 0], sizes = [1, 640], strides = [1, 1]} : vector<8x640xf32> to vector<1x640xf32>
    %c0_1 = arith.constant 0 : index
    %c0_2 = arith.constant 0 : index
    %6 = vector.load %arg0[%c0_1, %c0_2] : memref<8x640xf32, #tpu.memory_space<vmem>>, vector<8x640xf32>
    %7 = vector.extract_strided_slice %6 {offsets = [0, 639], sizes = [8, 1], strides = [1, 1]} : vector<8x640xf32> to vector<8x1xf32>
    %8 = vector.extract_strided_slice %6 {offsets = [0, 0], sizes = [8, 639], strides = [1, 1]} : vector<8x640xf32> to vector<8x639xf32>
    %9 = tpu.concatenate %7, %8 in 1 : vector<8x1xf32>, vector<8x639xf32> -> vector<8x640xf32>
    %10 = vector.broadcast %1 : vector<1x640xf32> to vector<8x640xf32>
    %11 = arith.mulf %9, %10 : vector<8x640xf32>
    %12 = vector.extract_strided_slice %6 {offsets = [0, 1], sizes = [8, 639], strides = [1, 1]} : vector<8x640xf32> to vector<8x639xf32>
    %13 = vector.extract_strided_slice %6 {offsets = [0, 0], sizes = [8, 1], strides = [1, 1]} : vector<8x640xf32> to vector<8x1xf32>
    %14 = tpu.concatenate %12, %13 in 1 : vector<8x639xf32>, vector<8x1xf32> -> vector<8x640xf32>
    %15 = vector.broadcast %2 : vector<1x640xf32> to vector<8x640xf32>
    %16 = arith.mulf %14, %15 : vector<8x640xf32>
    %17 = vector.extract_strided_slice %6 {offsets = [0, 15], sizes = [8, 625], strides = [1, 1]} : vector<8x640xf32> to vector<8x625xf32>
    %18 = vector.extract_strided_slice %6 {offsets = [0, 0], sizes = [8, 15], strides = [1, 1]} : vector<8x640xf32> to vector<8x15xf32>
    %19 = tpu.concatenate %17, %18 in 1 : vector<8x625xf32>, vector<8x15xf32> -> vector<8x640xf32>
    %20 = vector.broadcast %1 : vector<1x640xf32> to vector<8x640xf32>
    %21 = arith.mulf %19, %20 : vector<8x640xf32>
    %22 = vector.extract_strided_slice %6 {offsets = [0, 16], sizes = [8, 624], strides = [1, 1]} : vector<8x640xf32> to vector<8x624xf32>
    %23 = vector.extract_strided_slice %6 {offsets = [0, 0], sizes = [8, 16], strides = [1, 1]} : vector<8x640xf32> to vector<8x16xf32>
    %24 = tpu.concatenate %22, %23 in 1 : vector<8x624xf32>, vector<8x16xf32> -> vector<8x640xf32>
    %25 = vector.extract_strided_slice %6 {offsets = [0, 17], sizes = [8, 623], strides = [1, 1]} : vector<8x640xf32> to vector<8x623xf32>
    %26 = vector.extract_strided_slice %6 {offsets = [0, 0], sizes = [8, 17], strides = [1, 1]} : vector<8x640xf32> to vector<8x17xf32>
    %27 = tpu.concatenate %25, %26 in 1 : vector<8x623xf32>, vector<8x17xf32> -> vector<8x640xf32>
    %28 = vector.broadcast %2 : vector<1x640xf32> to vector<8x640xf32>
    %29 = arith.mulf %27, %28 : vector<8x640xf32>
    %30 = tpu.concatenate %11, %6, %16, %21, %24, %29 in 0 : vector<8x640xf32>, vector<8x640xf32>, vector<8x640xf32>, vector<8x640xf32>, vector<8x640xf32>, vector<8x640xf32> -> vector<48x640xf32>
    %c0_3 = arith.constant 0 : index
    %c0_4 = arith.constant 0 : index
    %31 = vector.load %arg1[%c0_3, %c0_4] : memref<16x48xf32, #tpu.memory_space<vmem>>, vector<16x48xf32>
    %cst = arith.constant dense<0.000000e+00> : vector<16x640xf32>
    %32 = tpu.matmul %31, %30, %cst {dimension_numbers = #tpu.dot_dimension_numbers<[1], [0], [0], [1], [0, 0, 1, 1], [], []>} : vector<16x48xf32>, vector<48x640xf32>, vector<16x640xf32> -> vector<16x640xf32>
    %c0_5 = arith.constant 0 : index
    %c0_6 = arith.constant 0 : index
    %33 = vector.load %arg2[%c0_5, %c0_6] : memref<16x1xf32, #tpu.memory_space<vmem>>, vector<16x1xf32>
    %34 = vector.broadcast %33 : vector<16x1xf32> to vector<16x640xf32>
    %35 = arith.addf %32, %34 : vector<16x640xf32>
    %36 = vector.extract_strided_slice %35 {offsets = [0, 0], sizes = [8, 640], strides = [1, 1]} : vector<16x640xf32> to vector<8x640xf32>
    %37 = vector.extract_strided_slice %35 {offsets = [8, 0], sizes = [8, 640], strides = [1, 1]} : vector<16x640xf32> to vector<8x640xf32>
    %38 = vector.broadcast %5 : vector<1x640xf32> to vector<8x640xf32>
    %39 = arith.mulf %36, %38 : vector<8x640xf32>
    %cst_7 = arith.constant dense<0.000000e+00> : vector<8xf32>
    %40 = vector.multi_reduction <add>, %39, %cst_7 [1] : vector<8x640xf32> to vector<8xf32>
    %41 = vector.shape_cast %40 : vector<8xf32> to vector<8x1xf32>
    %cst_8 = arith.constant 0.0018382353 : f32
    %42 = vector.broadcast %cst_8 : f32 to vector<8x1xf32>
    %43 = arith.mulf %41, %42 : vector<8x1xf32>
    %44 = arith.mulf %39, %36 : vector<8x640xf32>
    %cst_9 = arith.constant dense<0.000000e+00> : vector<8xf32>
    %45 = vector.multi_reduction <add>, %44, %cst_9 [1] : vector<8x640xf32> to vector<8xf32>
    %46 = vector.shape_cast %45 : vector<8xf32> to vector<8x1xf32>
    %cst_10 = arith.constant 0.0018382353 : f32
    %47 = vector.broadcast %cst_10 : f32 to vector<8x1xf32>
    %48 = arith.mulf %46, %47 : vector<8x1xf32>
    %49 = arith.mulf %43, %43 : vector<8x1xf32>
    %50 = arith.subf %48, %49 : vector<8x1xf32>
    %cst_11 = arith.constant 0.000000e+00 : f32
    %51 = vector.broadcast %cst_11 : f32 to vector<8x1xf32>
    %52 = arith.maximumf %50, %51 : vector<8x1xf32>
    %c0_12 = arith.constant 0 : index
    %c0_13 = arith.constant 0 : index
    %53 = vector.load %arg3[%c0_12, %c0_13] : memref<8x1xf32, #tpu.memory_space<vmem>>, vector<8x1xf32>
    %cst_14 = arith.constant 9.99999974E-6 : f32
    %54 = vector.broadcast %cst_14 : f32 to vector<8x1xf32>
    %55 = arith.addf %52, %54 : vector<8x1xf32>
    %56 = math.rsqrt %55 : vector<8x1xf32>
    %57 = arith.mulf %53, %56 : vector<8x1xf32>
    %58 = vector.broadcast %57 : vector<8x1xf32> to vector<8x640xf32>
    %59 = arith.mulf %36, %58 : vector<8x640xf32>
    %c0_15 = arith.constant 0 : index
    %c0_16 = arith.constant 0 : index
    %60 = vector.load %arg4[%c0_15, %c0_16] : memref<8x1xf32, #tpu.memory_space<vmem>>, vector<8x1xf32>
    %61 = arith.mulf %43, %57 : vector<8x1xf32>
    %62 = arith.subf %60, %61 : vector<8x1xf32>
    %63 = vector.broadcast %62 : vector<8x1xf32> to vector<8x640xf32>
    %64 = arith.addf %59, %63 : vector<8x640xf32>
    %cst_17 = arith.constant 0.000000e+00 : f32
    %65 = vector.broadcast %cst_17 : f32 to vector<8x640xf32>
    %66 = arith.cmpf ogt, %64, %65 : vector<8x640xf32>
    %cst_18 = arith.constant 0.000000e+00 : f32
    %67 = vector.broadcast %cst_18 : f32 to vector<8x640xf32>
    %68 = arith.minimumf %64, %67 : vector<8x640xf32>
    %69 = math.exp %68 : vector<8x640xf32>
    %cst_19 = arith.constant 1.000000e+00 : f32
    %70 = vector.broadcast %cst_19 : f32 to vector<8x640xf32>
    %71 = arith.subf %69, %70 : vector<8x640xf32>
    %cst_20 = arith.constant 1.67326319 : f32
    %72 = vector.broadcast %cst_20 : f32 to vector<8x640xf32>
    %73 = arith.mulf %72, %71 : vector<8x640xf32>
    %74 = arith.select %66, %64, %73 : vector<8x640xi1>, vector<8x640xf32>
    %cst_21 = arith.constant 1.05070102 : f32
    %75 = vector.broadcast %cst_21 : f32 to vector<8x640xf32>
    %76 = arith.mulf %75, %74 : vector<8x640xf32>
    %77 = vector.extract_strided_slice %76 {offsets = [0, 639], sizes = [8, 1], strides = [1, 1]} : vector<8x640xf32> to vector<8x1xf32>
    %78 = vector.extract_strided_slice %76 {offsets = [0, 0], sizes = [8, 639], strides = [1, 1]} : vector<8x640xf32> to vector<8x639xf32>
    %79 = tpu.concatenate %77, %78 in 1 : vector<8x1xf32>, vector<8x639xf32> -> vector<8x640xf32>
    %80 = vector.broadcast %1 : vector<1x640xf32> to vector<8x640xf32>
    %81 = arith.mulf %79, %80 : vector<8x640xf32>
    %82 = vector.extract_strided_slice %76 {offsets = [0, 1], sizes = [8, 639], strides = [1, 1]} : vector<8x640xf32> to vector<8x639xf32>
    %83 = vector.extract_strided_slice %76 {offsets = [0, 0], sizes = [8, 1], strides = [1, 1]} : vector<8x640xf32> to vector<8x1xf32>
    %84 = tpu.concatenate %82, %83 in 1 : vector<8x639xf32>, vector<8x1xf32> -> vector<8x640xf32>
    %85 = vector.broadcast %2 : vector<1x640xf32> to vector<8x640xf32>
    %86 = arith.mulf %84, %85 : vector<8x640xf32>
    %87 = vector.extract_strided_slice %76 {offsets = [0, 15], sizes = [8, 625], strides = [1, 1]} : vector<8x640xf32> to vector<8x625xf32>
    %88 = vector.extract_strided_slice %76 {offsets = [0, 0], sizes = [8, 15], strides = [1, 1]} : vector<8x640xf32> to vector<8x15xf32>
    %89 = tpu.concatenate %87, %88 in 1 : vector<8x625xf32>, vector<8x15xf32> -> vector<8x640xf32>
    %90 = vector.broadcast %1 : vector<1x640xf32> to vector<8x640xf32>
    %91 = arith.mulf %89, %90 : vector<8x640xf32>
    %92 = vector.extract_strided_slice %76 {offsets = [0, 16], sizes = [8, 624], strides = [1, 1]} : vector<8x640xf32> to vector<8x624xf32>
    %93 = vector.extract_strided_slice %76 {offsets = [0, 0], sizes = [8, 16], strides = [1, 1]} : vector<8x640xf32> to vector<8x16xf32>
    %94 = tpu.concatenate %92, %93 in 1 : vector<8x624xf32>, vector<8x16xf32> -> vector<8x640xf32>
    %95 = vector.extract_strided_slice %76 {offsets = [0, 17], sizes = [8, 623], strides = [1, 1]} : vector<8x640xf32> to vector<8x623xf32>
    %96 = vector.extract_strided_slice %76 {offsets = [0, 0], sizes = [8, 17], strides = [1, 1]} : vector<8x640xf32> to vector<8x17xf32>
    %97 = tpu.concatenate %95, %96 in 1 : vector<8x623xf32>, vector<8x17xf32> -> vector<8x640xf32>
    %98 = vector.broadcast %2 : vector<1x640xf32> to vector<8x640xf32>
    %99 = arith.mulf %97, %98 : vector<8x640xf32>
    %100 = tpu.concatenate %81, %76, %86, %91, %94, %99 in 0 : vector<8x640xf32>, vector<8x640xf32>, vector<8x640xf32>, vector<8x640xf32>, vector<8x640xf32>, vector<8x640xf32> -> vector<48x640xf32>
    %c0_22 = arith.constant 0 : index
    %c0_23 = arith.constant 0 : index
    %101 = vector.load %arg5[%c0_22, %c0_23] : memref<8x48xf32, #tpu.memory_space<vmem>>, vector<8x48xf32>
    %cst_24 = arith.constant dense<0.000000e+00> : vector<8x640xf32>
    %102 = tpu.matmul %101, %100, %cst_24 {dimension_numbers = #tpu.dot_dimension_numbers<[1], [0], [0], [1], [0, 0, 1, 1], [], []>} : vector<8x48xf32>, vector<48x640xf32>, vector<8x640xf32> -> vector<8x640xf32>
    %c0_25 = arith.constant 0 : index
    %c0_26 = arith.constant 0 : index
    %103 = vector.load %arg6[%c0_25, %c0_26] : memref<8x1xf32, #tpu.memory_space<vmem>>, vector<8x1xf32>
    %104 = vector.broadcast %103 : vector<8x1xf32> to vector<8x640xf32>
    %105 = arith.addf %102, %104 : vector<8x640xf32>
    %106 = arith.addf %105, %37 : vector<8x640xf32>
    %107 = vector.extract_strided_slice %106 {offsets = [0, 639], sizes = [8, 1], strides = [1, 1]} : vector<8x640xf32> to vector<8x1xf32>
    %108 = vector.extract_strided_slice %106 {offsets = [0, 0], sizes = [8, 639], strides = [1, 1]} : vector<8x640xf32> to vector<8x639xf32>
    %109 = tpu.concatenate %107, %108 in 1 : vector<8x1xf32>, vector<8x639xf32> -> vector<8x640xf32>
    %110 = vector.broadcast %1 : vector<1x640xf32> to vector<8x640xf32>
    %111 = arith.mulf %109, %110 : vector<8x640xf32>
    %112 = vector.extract_strided_slice %106 {offsets = [0, 1], sizes = [8, 639], strides = [1, 1]} : vector<8x640xf32> to vector<8x639xf32>
    %113 = vector.extract_strided_slice %106 {offsets = [0, 0], sizes = [8, 1], strides = [1, 1]} : vector<8x640xf32> to vector<8x1xf32>
    %114 = tpu.concatenate %112, %113 in 1 : vector<8x639xf32>, vector<8x1xf32> -> vector<8x640xf32>
    %115 = vector.broadcast %2 : vector<1x640xf32> to vector<8x640xf32>
    %116 = arith.mulf %114, %115 : vector<8x640xf32>
    %117 = vector.extract_strided_slice %106 {offsets = [0, 2], sizes = [8, 638], strides = [1, 1]} : vector<8x640xf32> to vector<8x638xf32>
    %118 = vector.extract_strided_slice %106 {offsets = [0, 0], sizes = [8, 2], strides = [1, 1]} : vector<8x640xf32> to vector<8x2xf32>
    %119 = tpu.concatenate %117, %118 in 1 : vector<8x638xf32>, vector<8x2xf32> -> vector<8x640xf32>
    %120 = vector.broadcast %3 : vector<1x640xf32> to vector<8x640xf32>
    %121 = arith.mulf %119, %120 : vector<8x640xf32>
    %122 = vector.extract_strided_slice %106 {offsets = [0, 3], sizes = [8, 637], strides = [1, 1]} : vector<8x640xf32> to vector<8x637xf32>
    %123 = vector.extract_strided_slice %106 {offsets = [0, 0], sizes = [8, 3], strides = [1, 1]} : vector<8x640xf32> to vector<8x3xf32>
    %124 = tpu.concatenate %122, %123 in 1 : vector<8x637xf32>, vector<8x3xf32> -> vector<8x640xf32>
    %125 = vector.broadcast %4 : vector<1x640xf32> to vector<8x640xf32>
    %126 = arith.mulf %124, %125 : vector<8x640xf32>
    %127 = tpu.concatenate %111, %106, %116, %121, %126 in 0 : vector<8x640xf32>, vector<8x640xf32>, vector<8x640xf32>, vector<8x640xf32>, vector<8x640xf32> -> vector<40x640xf32>
    %c0_27 = arith.constant 0 : index
    %c0_28 = arith.constant 0 : index
    %128 = vector.load %arg7[%c0_27, %c0_28] : memref<8x40xf32, #tpu.memory_space<vmem>>, vector<8x40xf32>
    %cst_29 = arith.constant dense<0.000000e+00> : vector<8x640xf32>
    %129 = tpu.matmul %128, %127, %cst_29 {dimension_numbers = #tpu.dot_dimension_numbers<[1], [0], [0], [1], [0, 0, 1, 1], [], []>} : vector<8x40xf32>, vector<40x640xf32>, vector<8x640xf32> -> vector<8x640xf32>
    %c0_30 = arith.constant 0 : index
    %c0_31 = arith.constant 0 : index
    %130 = vector.load %arg8[%c0_30, %c0_31] : memref<8x1xf32, #tpu.memory_space<vmem>>, vector<8x1xf32>
    %131 = vector.broadcast %130 : vector<8x1xf32> to vector<8x640xf32>
    %132 = arith.addf %129, %131 : vector<8x640xf32>
    %c0_32 = arith.constant 0 : index
    %c0_33 = arith.constant 0 : index
    %133 = vector.load %arg10[%c0_32, %c0_33] : memref<8x640xf32, #tpu.memory_space<vmem>>, vector<8x640xf32>
    tpu.vector_store %arg10[%c0_32, %c0_33], %132 {strides = array<i32>} : memref<8x640xf32, #tpu.memory_space<vmem>>, vector<8x640xf32>,
    return
  }
}

</mosaic_0001>

<llo_original>
// kernel: tpu_custom_call.1
$region0: #{tpu_custom_call.1}
  #allocation0 [shape = 'u32[]', space=smem, size = 0x4, offset = 0x4, fixed_abs, tag = 'smem constant byte address 0x4 - core index']
  #allocation1 [shape = 'u32[72,128]{1,0:T(1,128)}', space=vmem, size = 0x9000, scoped, tag = 'internal scratch']
  %s0 = inlined_call_operand.hbm [shape: f32[8,640], index: 0, kind: input, shape index: {}]
  %s1 = inlined_call_operand.hbm [shape: f32[8,640], index: 1, kind: output, shape index: {}]
  %s2 = sld [smem:[#allocation0]]
  $region18: #{tpu_custom_call.1} parent=0
    _
  %s4 = ssub.s32 1, %s2
  %s5 = scalar_select 0, %s4, %s2
  $region1: #{tpu_custom_call.1} parent=0
    #allocation2 [shape = 'u8[20480]{0}', space=vmem, size = 0x5000, scoped, tag = 'input window, operand 0, single buffered']
    #allocation3 [shape = 's32[1]{0}', space=sflag, size = 0x4, scoped, tag = 'scoped memory for tpu_custom_call.1']
    #allocation4 [shape = 's32[1]{0}', space=sflag, size = 0x4, scoped, tag = 'scoped memory for tpu_custom_call.1']
    #allocation5 [shape = 'u8[20480]{0}', space=vmem, size = 0x5000, scoped, tag = 'output window, operand 0, single buffered']
    %6 = vsyncpa [#allocation3], 0
    %7 = vsyncpa [#allocation4], 0
    // Predicated region
    $region2: #{tpu_custom_call.1} parent=1 // pred_check
      _
    $region3: #{tpu_custom_call.1} parent=1 // pred_check_branch
      %9 = sbr.rel (0) target = $region5
    $region4: #{tpu_custom_call.1} parent=1 // pred_region
      %11 = vsyncadd [#allocation3], 0
      %s13 = sshll.u32 %s0, 4
      %s14 = int_to_ptr.hbm [resolvable:$true] %s13
      %s15 = sshll.u32 [#allocation2], 4
      %s16 = int_to_ptr.vmem [resolvable:$true] %s15
      %18 = dma.hbm_to_vmem [thread:$0]  %s14, 640, %s16, [#allocation3]
    $region5: #{tpu_custom_call.1} parent=1 // pred_fallthru
      _
    // Predicated region
    $region6: #{tpu_custom_call.1} parent=1 // pred_check
      _
    $region7: #{tpu_custom_call.1} parent=1 // pred_check_branch
      %20 = sbr.rel (0) target = $region9
    $region8: #{tpu_custom_call.1} parent=1 // pred_region
      %22 = dma.done [#allocation3], 640
    $region9: #{tpu_custom_call.1} parent=1 // pred_fallthru
      _
    %v23 = vld [vmem:[#allocation2] sm:$0xff]
    %v24 = vld [vmem:[#allocation2 + $0x8] sm:$0xff]
    %v25 = vld [vmem:[#allocation2 + $0x10] sm:$0xff]
    %v26 = vld [vmem:[#allocation2 + $0x18] sm:$0xff]
    %v27 = vld [vmem:[#allocation2 + $0x20] sm:$0xff]
    %28 = vrot.lane.b32.xlu0 %v23, 1
    %v29 = vpop.permute.xlu0 %28
    %30 = vrot.lane.b32.xlu0 %v24, 1
    %v31 = vpop.permute.xlu0 %30
    %32 = vrot.lane.b32.xlu0 %v25, 1
    %v33 = vpop.permute.xlu0 %32
    %34 = vrot.lane.b32.xlu0 %v26, 1
    %v35 = vpop.permute.xlu0 %34
    %36 = vrot.lane.b32.xlu0 %v27, 1
    %v37 = vpop.permute.xlu0 %36
    %v38 = vlaneseq
    %v39 = vand.u32 %v38, 127
    %vm40 = vcmp.lt.s32.totalorder %v39, 1
    %v41 = vsel %vm40, %v35, %v37
    %v42 = vsel %vm40, %v33, %v35
    %v43 = vsel %vm40, %v31, %v33
    %v44 = vsel %vm40, %v29, %v31
    %v45 = vsel %vm40, %v37, %v29
    %46 = vrot.lane.b32.xlu0 %v23, 125
    %v47 = vpop.permute.xlu0 %46
    %48 = vrot.lane.b32.xlu0 %v24, 125
    %v49 = vpop.permute.xlu0 %48
    %50 = vrot.lane.b32.xlu0 %v25, 125
    %v51 = vpop.permute.xlu0 %50
    %52 = vrot.lane.b32.xlu0 %v26, 125
    %v53 = vpop.permute.xlu0 %52
    %54 = vrot.lane.b32.xlu0 %v27, 125
    %v55 = vpop.permute.xlu0 %54
    %vm56 = vcmp.lt.s32.totalorder %v39, 125
    %v57 = vsel %vm56, %v53, %v55
    %v58 = vsel %vm56, %v51, %v53
    %v59 = vsel %vm56, %v49, %v51
    %v60 = vsel %vm56, %v47, %v49
    %v61 = vsel %vm56, %v55, %v47
    %v62 = vadd.f32 %v45, %v60
    %v63 = vadd.f32 %v44, %v59
    %v64 = vadd.f32 %v43, %v58
    %v65 = vadd.f32 %v42, %v57
    %v66 = vadd.f32 %v41, %v61
    %67 = vst [vmem:[#allocation5] sm:$0xff] %v62
    %68 = vst [vmem:[#allocation5 + $0x8] sm:$0xff] %v63
    %69 = vst [vmem:[#allocation5 + $0x10] sm:$0xff] %v64
    %70 = vst [vmem:[#allocation5 + $0x18] sm:$0xff] %v65
    %71 = vst [vmem:[#allocation5 + $0x20] sm:$0xff] %v66
    // Predicated region
    $region10: #{tpu_custom_call.1} parent=1 // pred_check
      _
    $region11: #{tpu_custom_call.1} parent=1 // pred_check_branch
      %73 = sbr.rel (0) target = $region13
    $region12: #{tpu_custom_call.1} parent=1 // pred_region
      %75 = vsyncadd [#allocation4], 0
      %s77 = sshll.u32 [#allocation5], 4
      %s78 = int_to_ptr.vmem [resolvable:$true] %s77
      %s79 = sshll.u32 %s1, 4
      %s80 = int_to_ptr.hbm [resolvable:$true] %s79
      %82 = dma.vmem_to_hbm [thread:$0]  %s78, 640, %s80, [#allocation4]
    $region13: #{tpu_custom_call.1} parent=1 // pred_fallthru
      _
    // Predicated region
    $region14: #{tpu_custom_call.1} parent=1 // pred_check
      _
    $region15: #{tpu_custom_call.1} parent=1 // pred_check_branch
      %84 = sbr.rel (0) target = $region17
    $region16: #{tpu_custom_call.1} parent=1 // pred_region
      %86 = dma.done [#allocation4], 640
    $region17: #{tpu_custom_call.1} parent=1 // pred_fallthru
      _
    %87 = vsyncpa [#allocation3], 1
    %88 = vsyncpa [#allocation4], 1

// kernel: _forward_jit.1
$region0: #{_forward_jit.1}
  #allocation0 [shape = 'u32[]', space=smem, size = 0x4, offset = 0x4, fixed_abs, tag = 'smem constant byte address 0x4 - core index']
  #allocation1 [shape = 'u32[72,128]{1,0:T(1,128)}', space=vmem, size = 0x9000, scoped, tag = 'internal scratch']
  %s0 = inlined_call_operand.vmem [shape: f32[8,640], index: 0, kind: input, shape index: {}]
  %s1 = inlined_call_operand.vmem [shape: f32[16,48], index: 1, kind: input, shape index: {}]
  %s2 = inlined_call_operand.vmem [shape: f32[16,1], index: 2, kind: input, shape index: {}]
  %s3 = inlined_call_operand.vmem [shape: f32[8,1], index: 3, kind: input, shape index: {}]
  %s4 = inlined_call_operand.vmem [shape: f32[8,1], index: 4, kind: input, shape index: {}]
  %s5 = inlined_call_operand.vmem [shape: f32[8,48], index: 5, kind: input, shape index: {}]
  %s6 = inlined_call_operand.vmem [shape: f32[8,1], index: 6, kind: input, shape index: {}]
  %s7 = inlined_call_operand.vmem [shape: f32[8,40], index: 7, kind: input, shape index: {}]
  %s8 = inlined_call_operand.vmem [shape: f32[8,1], index: 8, kind: input, shape index: {}]
  %s9 = inlined_call_operand.vmem [shape: f32[8,640], index: 9, kind: input, shape index: {}]
  %s10 = inlined_call_operand.vmem [shape: f32[8,640], index: 10, kind: output, shape index: {}]
  %s11 = sld [smem:[#allocation0]]
  $region50: #{_forward_jit.1} parent=0
    _
  %s13 = ssub.s32 1, %s11
  %s14 = scalar_select 0, %s13, %s11
  // Predicated region
  $region2: #{_forward_jit.1} parent=0 // pred_check
    _
  $region3: #{_forward_jit.1} parent=0 // pred_check_branch
    %16 = sbr.rel (0) target = $region5
  $region4: #{_forward_jit.1} parent=0 // pred_region
    _
  $region5: #{_forward_jit.1} parent=0 // pred_fallthru
    _
  // Predicated region
  $region6: #{_forward_jit.1} parent=0 // pred_check
    _
  $region7: #{_forward_jit.1} parent=0 // pred_check_branch
    %18 = sbr.rel (0) target = $region9
  $region8: #{_forward_jit.1} parent=0 // pred_region
    _
  $region9: #{_forward_jit.1} parent=0 // pred_fallthru
    _
  // Predicated region
  $region10: #{_forward_jit.1} parent=0 // pred_check
    _
  $region11: #{_forward_jit.1} parent=0 // pred_check_branch
    %20 = sbr.rel (0) target = $region13
  $region12: #{_forward_jit.1} parent=0 // pred_region
    _
  $region13: #{_forward_jit.1} parent=0 // pred_fallthru
    _
  // Predicated region
  $region14: #{_forward_jit.1} parent=0 // pred_check
    _
  $region15: #{_forward_jit.1} parent=0 // pred_check_branch
    %22 = sbr.rel (0) target = $region17
  $region16: #{_forward_jit.1} parent=0 // pred_region
    _
  $region17: #{_forward_jit.1} parent=0 // pred_fallthru
    _
  // Predicated region
  $region18: #{_forward_jit.1} parent=0 // pred_check
    _
  $region19: #{_forward_jit.1} parent=0 // pred_check_branch
    %24 = sbr.rel (0) target = $region21
  $region20: #{_forward_jit.1} parent=0 // pred_region
    _
  $region21: #{_forward_jit.1} parent=0 // pred_fallthru
    _
  // Predicated region
  $region22: #{_forward_jit.1} parent=0 // pred_check
    _
  $region23: #{_forward_jit.1} parent=0 // pred_check_branch
    %26 = sbr.rel (0) target = $region25
  $region24: #{_forward_jit.1} parent=0 // pred_region
    _
  $region25: #{_forward_jit.1} parent=0 // pred_fallthru
    _
  // Predicated region
  $region26: #{_forward_jit.1} parent=0 // pred_check
    _
  $region27: #{_forward_jit.1} parent=0 // pred_check_branch
    %28 = sbr.rel (0) target = $region29
  $region28: #{_forward_jit.1} parent=0 // pred_region
    _
  $region29: #{_forward_jit.1} parent=0 // pred_fallthru
    _
  // Predicated region
  $region30: #{_forward_jit.1} parent=0 // pred_check
    _
  $region31: #{_forward_jit.1} parent=0 // pred_check_branch
    %30 = sbr.rel (0) target = $region33
  $region32: #{_forward_jit.1} parent=0 // pred_region
    _
  $region33: #{_forward_jit.1} parent=0 // pred_fallthru
    _
  // Predicated region
  $region34: #{_forward_jit.1} parent=0 // pred_check
    _
  $region35: #{_forward_jit.1} parent=0 // pred_check_branch
    %32 = sbr.rel (0) target = $region37
  $region36: #{_forward_jit.1} parent=0 // pred_region
    _
  $region37: #{_forward_jit.1} parent=0 // pred_fallthru
    _
  // Predicated region
  $region38: #{_forward_jit.1} parent=0 // pred_check
    _
  $region39: #{_forward_jit.1} parent=0 // pred_check_branch
    %34 = sbr.rel (0) target = $region41
  $region40: #{_forward_jit.1} parent=0 // pred_region
    _
  $region41: #{_forward_jit.1} parent=0 // pred_fallthru
    _
  %v35 = vld [vmem:[%s9] sm:$0xff]
  %v36 = vld [vmem:[%s9 + $0x8] sm:$0xff]
  %v37 = vld [vmem:[%s9 + $0x10] sm:$0xff]
  %v38 = vld [vmem:[%s9 + $0x18] sm:$0xff]
  %v39 = vld [vmem:[%s9 + $0x20] sm:$0xff]
  %v40 = vld [vmem:[%s0] sm:$0xff]
  %v41 = vld [vmem:[%s0 + $0x8] sm:$0xff]
  %v42 = vld [vmem:[%s0 + $0x10] sm:$0xff]
  %v43 = vld [vmem:[%s0 + $0x18] sm:$0xff]
  %v44 = vld [vmem:[%s0 + $0x20] sm:$0xff]
  %46 = vrot.lane.b32.xlu0 %v44, 1
  %v47 = vpop.permute.xlu0 %46
  %53 = vrot.lane.b32.xlu0 %v40, 1
  %v54 = vpop.permute.xlu0 %53
  %55 = vrot.lane.b32.xlu0 %v41, 1
  %v56 = vpop.permute.xlu0 %55
  %57 = vrot.lane.b32.xlu0 %v42, 1
  %v58 = vpop.permute.xlu0 %57
  %59 = vrot.lane.b32.xlu0 %v43, 1
  %v60 = vpop.permute.xlu0 %59
  %vm61 = vcmask 7168
  %v62 = vsel %vm61, %v54, %v56
  %v63 = vsel %vm61, %v56, %v58
  %v64 = vsel %vm61, %v58, %v60
  %v65 = vsel %vm61, %v60, %v47
  %v71 = vsel %vm61, %v47, %v54
  %v72 = vperm.slane %v35, 0
  %v73 = vperm.slane %v36, 0
  %v74 = vperm.slane %v37, 0
  %v75 = vperm.slane %v38, 0
  %v76 = vperm.slane %v39, 0
  %v77 = vmul.f32 %v71, %v72
  %v78 = vmul.f32 %v62, %v73
  %v79 = vmul.f32 %v63, %v74
  %v80 = vmul.f32 %v64, %v75
  %v81 = vmul.f32 %v65, %v76
  %82 = vrot.lane.b32.xlu0 %v40, 127
  %v83 = vpop.permute.xlu0 %82
  %84 = vrot.lane.b32.xlu0 %v41, 127
  %v85 = vpop.permute.xlu0 %84
  %86 = vrot.lane.b32.xlu0 %v42, 127
  %v87 = vpop.permute.xlu0 %86
  %88 = vrot.lane.b32.xlu0 %v43, 127
  %v89 = vpop.permute.xlu0 %88
  %90 = vrot.lane.b32.xlu0 %v44, 127
  %v91 = vpop.permute.xlu0 %90
  %vm92 = vcmask 1039360
  %v93 = vsel %vm92, %v83, %v85
  %v94 = vsel %vm92, %v85, %v87
  %v95 = vsel %vm92, %v87, %v89
  %v96 = vsel %vm92, %v89, %v91
  %v103 = vsel %vm92, %v91, %v83
  %v104 = vperm.slane %v35, 1
  %v105 = vperm.slane %v36, 1
  %v106 = vperm.slane %v37, 1
  %v107 = vperm.slane %v38, 1
  %v108 = vperm.slane %v39, 1
  %v109 = vmul.f32 %v93, %v104
  %v110 = vmul.f32 %v94, %v105
  %v111 = vmul.f32 %v95, %v106
  %v112 = vmul.f32 %v96, %v107
  %v113 = vmul.f32 %v103, %v108
  %114 = vrot.lane.b32.xlu0 %v40, 113
  %v115 = vpop.permute.xlu0 %114
  %116 = vrot.lane.b32.xlu0 %v41, 113
  %v117 = vpop.permute.xlu0 %116
  %118 = vrot.lane.b32.xlu0 %v42, 113
  %v119 = vpop.permute.xlu0 %118
  %120 = vrot.lane.b32.xlu0 %v43, 113
  %v121 = vpop.permute.xlu0 %120
  %122 = vrot.lane.b32.xlu0 %v44, 113
  %v123 = vpop.permute.xlu0 %122
  %vm124 = vcmask 924672
  %v125 = vsel %vm124, %v115, %v117
  %v126 = vsel %vm124, %v117, %v119
  %v127 = vsel %vm124, %v119, %v121
  %v128 = vsel %vm124, %v121, %v123
  %v135 = vsel %vm124, %v123, %v115
  %v136 = vmul.f32 %v125, %v72
  %v137 = vmul.f32 %v126, %v73
  %v138 = vmul.f32 %v127, %v74
  %v139 = vmul.f32 %v128, %v75
  %v140 = vmul.f32 %v135, %v76
  %141 = vrot.lane.b32.xlu0 %v40, 112
  %v142 = vpop.permute.xlu0 %141
  %143 = vrot.lane.b32.xlu0 %v41, 112
  %v144 = vpop.permute.xlu0 %143
  %145 = vrot.lane.b32.xlu0 %v42, 112
  %v146 = vpop.permute.xlu0 %145
  %147 = vrot.lane.b32.xlu0 %v43, 112
  %v148 = vpop.permute.xlu0 %147
  %149 = vrot.lane.b32.xlu0 %v44, 112
  %v150 = vpop.permute.xlu0 %149
  %vm151 = vcmask 916480
  %v152 = vsel %vm151, %v142, %v144
  %v153 = vsel %vm151, %v144, %v146
  %v154 = vsel %vm151, %v146, %v148
  %v155 = vsel %vm151, %v148, %v150
  %v162 = vsel %vm151, %v150, %v142
  %163 = vrot.lane.b32.xlu0 %v40, 111
  %v164 = vpop.permute.xlu0 %163
  %165 = vrot.lane.b32.xlu0 %v41, 111
  %v166 = vpop.permute.xlu0 %165
  %167 = vrot.lane.b32.xlu0 %v42, 111
  %v168 = vpop.permute.xlu0 %167
  %169 = vrot.lane.b32.xlu0 %v43, 111
  %v170 = vpop.permute.xlu0 %169
  %171 = vrot.lane.b32.xlu0 %v44, 111
  %v172 = vpop.permute.xlu0 %171
  %vm173 = vcmask 908288
  %v174 = vsel %vm173, %v164, %v166
  %v175 = vsel %vm173, %v166, %v168
  %v176 = vsel %vm173, %v168, %v170
  %v177 = vsel %vm173, %v170, %v172
  %v184 = vsel %vm173, %v172, %v164
  %v185 = vmul.f32 %v174, %v104
  %v186 = vmul.f32 %v175, %v105
  %v187 = vmul.f32 %v176, %v106
  %v188 = vmul.f32 %v177, %v107
  %v189 = vmul.f32 %v184, %v108
  %v190 = vld [vmem:[%s1] sm:$0xff]
  %v191 = vld [vmem:[%s1 + $0x8] sm:$0xff]
  %v192 = vld [vmem:[%s2] sm:$0xff]
  %v193 = vld [vmem:[%s2 + $0x8] sm:$0xff]
  %195 = vset.pattern.permute.xlu0 0
  %196 = vperm.xlu0 %195, %v192
  %v197 = vpop.permute.xlu0 %196
  %200 = vset.pattern.permute.xlu0 0
  %201 = vperm.xlu0 %200, %v193
  %v202 = vpop.permute.xlu0 %201
  %vm204 = vcmask 392192
  %v206 = vsel %vm204, %v190, 0
  %v209 = vsel %vm204, %v191, 0
  %211 = vmatpush.msra.mxu0 0.0
  %212 = vmatpush.msra.mxu0 0.0
  %213 = vmatpush.msra.mxu0 0.0
  %214 = vmatpush.msra.mxu0 0.0
  %215 = vmatpush.msra.mxu0 0.0
  %216 = vmatpush.msra.mxu0 0.0
  %217 = vmatpush.msra.mxu0 0.0
  %218 = vmatpush.msra.mxu0 0.0
  %219 = vmatpush.msra.mxu0 0.0
  %220 = vmatpush.msra.mxu0 0.0
  %221 = vmatpush.msra.mxu0 %v185
  %222 = vmatpush.msra.mxu0 %v152
  %223 = vmatpush.msra.mxu0 %v136
  %224 = vmatpush.msra.mxu0 %v109
  %225 = vmatpush.msra.mxu0 %v40
  %226 = vmatpush.msra.mxu0 %v77
  %227 = vmatmul.f32.gmra.mxu0 %v206
  %v228 = vpop.f32.mrf.mxu0
  %v229 = vadd.f32 %v197, %v228
  %230 = vmatmul.f32.gmra.mxu0 %v209
  %v231 = vpop.f32.mrf.mxu0
  %v232 = vadd.f32 %v202, %v231
  %233 = vdwg.mxu0
  %234 = vmatpush.msra.mxu0 0.0
  %235 = vmatpush.msra.mxu0 0.0
  %236 = vmatpush.msra.mxu0 0.0
  %237 = vmatpush.msra.mxu0 0.0
  %238 = vmatpush.msra.mxu0 0.0
  %239 = vmatpush.msra.mxu0 0.0
  %240 = vmatpush.msra.mxu0 0.0
  %241 = vmatpush.msra.mxu0 0.0
  %242 = vmatpush.msra.mxu0 0.0
  %243 = vmatpush.msra.mxu0 0.0
  %244 = vmatpush.msra.mxu0 %v186
  %245 = vmatpush.msra.mxu0 %v153
  %246 = vmatpush.msra.mxu0 %v137
  %247 = vmatpush.msra.mxu0 %v110
  %248 = vmatpush.msra.mxu0 %v41
  %249 = vmatpush.msra.mxu0 %v78
  %250 = vmatmul.f32.gmra.mxu0 %v206
  %v251 = vpop.f32.mrf.mxu0
  %v252 = vadd.f32 %v197, %v251
  %253 = vmatmul.f32.gmra.mxu0 %v209
  %v254 = vpop.f32.mrf.mxu0
  %v255 = vadd.f32 %v202, %v254
  %256 = vdwg.mxu0
  %257 = vmatpush.msra.mxu0 0.0
  %258 = vmatpush.msra.mxu0 0.0
  %259 = vmatpush.msra.mxu0 0.0
  %260 = vmatpush.msra.mxu0 0.0
  %261 = vmatpush.msra.mxu0 0.0
  %262 = vmatpush.msra.mxu0 0.0
  %263 = vmatpush.msra.mxu0 0.0
  %264 = vmatpush.msra.mxu0 0.0
  %265 = vmatpush.msra.mxu0 0.0
  %266 = vmatpush.msra.mxu0 0.0
  %267 = vmatpush.msra.mxu0 %v187
  %268 = vmatpush.msra.mxu0 %v154
  %269 = vmatpush.msra.mxu0 %v138
  %270 = vmatpush.msra.mxu0 %v111
  %271 = vmatpush.msra.mxu0 %v42
  %272 = vmatpush.msra.mxu0 %v79
  %273 = vmatmul.f32.gmra.mxu0 %v206
  %v274 = vpop.f32.mrf.mxu0
  %v275 = vadd.f32 %v197, %v274
  %276 = vmatmul.f32.gmra.mxu0 %v209
  %v277 = vpop.f32.mrf.mxu0
  %v278 = vadd.f32 %v202, %v277
  %279 = vdwg.mxu0
  %280 = vmatpush.msra.mxu0 0.0
  %281 = vmatpush.msra.mxu0 0.0
  %282 = vmatpush.msra.mxu0 0.0
  %283 = vmatpush.msra.mxu0 0.0
  %284 = vmatpush.msra.mxu0 0.0
  %285 = vmatpush.msra.mxu0 0.0
  %286 = vmatpush.msra.mxu0 0.0
  %287 = vmatpush.msra.mxu0 0.0
  %288 = vmatpush.msra.mxu0 0.0
  %289 = vmatpush.msra.mxu0 0.0
  %290 = vmatpush.msra.mxu0 %v188
  %291 = vmatpush.msra.mxu0 %v155
  %292 = vmatpush.msra.mxu0 %v139
  %293 = vmatpush.msra.mxu0 %v112
  %294 = vmatpush.msra.mxu0 %v43
  %295 = vmatpush.msra.mxu0 %v80
  %296 = vmatmul.f32.gmra.mxu0 %v206
  %v297 = vpop.f32.mrf.mxu0
  %v298 = vadd.f32 %v197, %v297
  %299 = vmatmul.f32.gmra.mxu0 %v209
  %v300 = vpop.f32.mrf.mxu0
  %v301 = vadd.f32 %v202, %v300
  %302 = vdwg.mxu0
  %303 = vmatpush.msra.mxu0 0.0
  %304 = vmatpush.msra.mxu0 0.0
  %305 = vmatpush.msra.mxu0 0.0
  %306 = vmatpush.msra.mxu0 0.0
  %307 = vmatpush.msra.mxu0 0.0
  %308 = vmatpush.msra.mxu0 0.0
  %309 = vmatpush.msra.mxu0 0.0
  %310 = vmatpush.msra.mxu0 0.0
  %311 = vmatpush.msra.mxu0 0.0
  %312 = vmatpush.msra.mxu0 0.0
  %313 = vmatpush.msra.mxu0 %v189
  %314 = vmatpush.msra.mxu0 %v162
  %315 = vmatpush.msra.mxu0 %v140
  %316 = vmatpush.msra.mxu0 %v113
  %317 = vmatpush.msra.mxu0 %v44
  %318 = vmatpush.msra.mxu0 %v81
  %319 = vmatmul.f32.gmra.mxu0 %v206
  %v320 = vpop.f32.mrf.mxu0
  %v321 = vadd.f32 %v197, %v320
  %322 = vmatmul.f32.gmra.mxu0 %v209
  %v323 = vpop.f32.mrf.mxu0
  %v324 = vadd.f32 %v202, %v323
  %325 = vdwg.mxu0
  %v326 = vperm.slane %v35, 4
  %v327 = vperm.slane %v36, 4
  %v328 = vperm.slane %v37, 4
  %v329 = vperm.slane %v38, 4
  %v330 = vperm.slane %v39, 4
  %v331 = vmul.f32 %v229, %v326
  %v332 = vmul.f32 %v252, %v327
  %v333 = vmul.f32 %v275, %v328
  %v334 = vmul.f32 %v298, %v329
  %v335 = vmul.f32 %v321, %v330
  %v336 = vadd.f32 %v331, %v332
  %v337 = vadd.f32 %v336, %v333
  %v338 = vadd.f32 %v337, %v334
  %v339 = vadd.f32 %v338, %v335
  %340 = vadd.xlane.f32.xlu0 %v339
  %v341 = vpop.xlane.xlu0 %340
  %v342 = vmul.f32 %v341, 0.0018382353
  %v343 = vmul.f32 %v331, %v229
  %v344 = vmul.f32 %v332, %v252
  %v345 = vmul.f32 %v333, %v275
  %v346 = vmul.f32 %v334, %v298
  %v347 = vmul.f32 %v335, %v321
  %v348 = vadd.f32 %v343, %v344
  %v349 = vadd.f32 %v348, %v345
  %v350 = vadd.f32 %v349, %v346
  %v351 = vadd.f32 %v350, %v347
  %352 = vadd.xlane.f32.xlu0 %v351
  %v353 = vpop.xlane.xlu0 %352
  %v354 = vmul.f32 %v353, 0.0018382353
  %v355 = vmul.f32 %v342, %v342
  %v356 = vsub.f32 %v354, %v355
  %v357 = vmax.f32 %v356, 0.0
  %v358 = vld [vmem:[%s3] sm:$0xff]
  %v359 = vadd.f32 %v357, 1e-05
  %v360 = vrsqrt.pop %v359
  %v361 = vmul.f32 %v360, %v359
  %v362 = vmul.f32 %v361, %v360
  %v363 = vmul.f32 0.5, %v362
  %v364 = vsub.f32 1.5, %v363
  %v365 = vmul.f32 %v360, %v364
  %vm366 = vweird.f32 %v359
  %vm367 = vweird.f32 %v360
  %vm368 = vmor %vm366, %vm367
  %v369 = vsel %vm368, %v360, %v365
  %v370 = vmul.f32 %v358, %v369
  %372 = vset.pattern.permute.xlu0 0
  %373 = vperm.xlu0 %372, %v370
  %v374 = vpop.permute.xlu0 %373
  %v376 = vmul.f32 %v229, %v374
  %v377 = vmul.f32 %v252, %v374
  %v378 = vmul.f32 %v275, %v374
  %v379 = vmul.f32 %v298, %v374
  %v380 = vmul.f32 %v321, %v374
  %v381 = vld [vmem:[%s4] sm:$0xff]
  %v382 = vmul.f32 %v342, %v370
  %v383 = vsub.f32 %v381, %v382
  %385 = vset.pattern.permute.xlu0 0
  %386 = vperm.xlu0 %385, %v383
  %v387 = vpop.permute.xlu0 %386
  %v389 = vadd.f32 %v376, %v387
  %v390 = vadd.f32 %v377, %v387
  %v391 = vadd.f32 %v378, %v387
  %v392 = vadd.f32 %v379, %v387
  %v393 = vadd.f32 %v380, %v387
  %vm394 = vcmp.gt.f32.partialorder %v389, 0.0
  %vm395 = vcmp.gt.f32.partialorder %v390, 0.0
  %vm396 = vcmp.gt.f32.partialorder %v391, 0.0
  %vm397 = vcmp.gt.f32.partialorder %v392, 0.0
  %vm398 = vcmp.gt.f32.partialorder %v393, 0.0
  %v399 = vmin.f32 %v389, 0.0
  %v400 = vmin.f32 %v390, 0.0
  %v401 = vmin.f32 %v391, 0.0
  %v402 = vmin.f32 %v392, 0.0
  %v403 = vmin.f32 %v393, 0.0
  %v404 = vmul.f32 %v399, 1.442695
  %v405 = vpow.pop %v404
  %v406 = vmul.f32 %v400, 1.442695
  %v407 = vpow.pop %v406
  %v408 = vmul.f32 %v401, 1.442695
  %v409 = vpow.pop %v408
  %v410 = vmul.f32 %v402, 1.442695
  %v411 = vpow.pop %v410
  %v412 = vmul.f32 %v403, 1.442695
  %v413 = vpow.pop %v412
  %v414 = vsub.f32 %v405, 1.0
  %v415 = vsub.f32 %v407, 1.0
  %v416 = vsub.f32 %v409, 1.0
  %v417 = vsub.f32 %v411, 1.0
  %v418 = vsub.f32 %v413, 1.0
  %v419 = vmul.f32 %v414, 1.6732632
  %v420 = vmul.f32 %v415, 1.6732632
  %v421 = vmul.f32 %v416, 1.6732632
  %v422 = vmul.f32 %v417, 1.6732632
  %v423 = vmul.f32 %v418, 1.6732632
  %v424 = vsel %vm394, %v389, %v419
  %v425 = vsel %vm395, %v390, %v420
  %v426 = vsel %vm396, %v391, %v421
  %v427 = vsel %vm397, %v392, %v422
  %v428 = vsel %vm398, %v393, %v423
  %v429 = vmul.f32 %v424, 1.050701
  %v430 = vmul.f32 %v425, 1.050701
  %v431 = vmul.f32 %v426, 1.050701
  %v432 = vmul.f32 %v427, 1.050701
  %v433 = vmul.f32 %v428, 1.050701
  %435 = vrot.lane.b32.xlu0 %v433, 1
  %v436 = vpop.permute.xlu0 %435
  %442 = vrot.lane.b32.xlu0 %v429, 1
  %v443 = vpop.permute.xlu0 %442
  %444 = vrot.lane.b32.xlu0 %v430, 1
  %v445 = vpop.permute.xlu0 %444
  %446 = vrot.lane.b32.xlu0 %v431, 1
  %v447 = vpop.permute.xlu0 %446
  %448 = vrot.lane.b32.xlu0 %v432, 1
  %v449 = vpop.permute.xlu0 %448
  %v450 = vsel %vm61, %v443, %v445
  %v451 = vsel %vm61, %v445, %v447
  %v452 = vsel %vm61, %v447, %v449
  %v453 = vsel %vm61, %v449, %v436
  %v459 = vsel %vm61, %v436, %v443
  %v460 = vmul.f32 %v459, %v72
  %v461 = vmul.f32 %v450, %v73
  %v462 = vmul.f32 %v451, %v74
  %v463 = vmul.f32 %v452, %v75
  %v464 = vmul.f32 %v453, %v76
  %465 = vrot.lane.b32.xlu0 %v429, 127
  %v466 = vpop.permute.xlu0 %465
  %467 = vrot.lane.b32.xlu0 %v430, 127
  %v468 = vpop.permute.xlu0 %467
  %469 = vrot.lane.b32.xlu0 %v431, 127
  %v470 = vpop.permute.xlu0 %469
  %471 = vrot.lane.b32.xlu0 %v432, 127
  %v472 = vpop.permute.xlu0 %471
  %473 = vrot.lane.b32.xlu0 %v433, 127
  %v474 = vpop.permute.xlu0 %473
  %v475 = vsel %vm92, %v466, %v468
  %v476 = vsel %vm92, %v468, %v470
  %v477 = vsel %vm92, %v470, %v472
  %v478 = vsel %vm92, %v472, %v474
  %v485 = vsel %vm92, %v474, %v466
  %v486 = vmul.f32 %v475, %v104
  %v487 = vmul.f32 %v476, %v105
  %v488 = vmul.f32 %v477, %v106
  %v489 = vmul.f32 %v478, %v107
  %v490 = vmul.f32 %v485, %v108
  %491 = vrot.lane.b32.xlu0 %v429, 113
  %v492 = vpop.permute.xlu0 %491
  %493 = vrot.lane.b32.xlu0 %v430, 113
  %v494 = vpop.permute.xlu0 %493
  %495 = vrot.lane.b32.xlu0 %v431, 113
  %v496 = vpop.permute.xlu0 %495
  %497 = vrot.lane.b32.xlu0 %v432, 113
  %v498 = vpop.permute.xlu0 %497
  %499 = vrot.lane.b32.xlu0 %v433, 113
  %v500 = vpop.permute.xlu0 %499
  %v501 = vsel %vm124, %v492, %v494
  %v502 = vsel %vm124, %v494, %v496
  %v503 = vsel %vm124, %v496, %v498
  %v504 = vsel %vm124, %v498, %v500
  %v511 = vsel %vm124, %v500, %v492
  %v512 = vmul.f32 %v501, %v72
  %v513 = vmul.f32 %v502, %v73
  %v514 = vmul.f32 %v503, %v74
  %v515 = vmul.f32 %v504, %v75
  %v516 = vmul.f32 %v511, %v76
  %517 = vrot.lane.b32.xlu0 %v429, 112
  %v518 = vpop.permute.xlu0 %517
  %519 = vrot.lane.b32.xlu0 %v430, 112
  %v520 = vpop.permute.xlu0 %519
  %521 = vrot.lane.b32.xlu0 %v431, 112
  %v522 = vpop.permute.xlu0 %521
  %523 = vrot.lane.b32.xlu0 %v432, 112
  %v524 = vpop.permute.xlu0 %523
  %525 = vrot.lane.b32.xlu0 %v433, 112
  %v526 = vpop.permute.xlu0 %525
  %v527 = vsel %vm151, %v518, %v520
  %v528 = vsel %vm151, %v520, %v522
  %v529 = vsel %vm151, %v522, %v524
  %v530 = vsel %vm151, %v524, %v526
  %v537 = vsel %vm151, %v526, %v518
  %538 = vrot.lane.b32.xlu0 %v429, 111
  %v539 = vpop.permute.xlu0 %538
  %540 = vrot.lane.b32.xlu0 %v430, 111
  %v541 = vpop.permute.xlu0 %540
  %542 = vrot.lane.b32.xlu0 %v431, 111
  %v543 = vpop.permute.xlu0 %542
  %544 = vrot.lane.b32.xlu0 %v432, 111
  %v545 = vpop.permute.xlu0 %544
  %546 = vrot.lane.b32.xlu0 %v433, 111
  %v547 = vpop.permute.xlu0 %546
  %v548 = vsel %vm173, %v539, %v541
  %v549 = vsel %vm173, %v541, %v543
  %v550 = vsel %vm173, %v543, %v545
  %v551 = vsel %vm173, %v545, %v547
  %v558 = vsel %vm173, %v547, %v539
  %v559 = vmul.f32 %v548, %v104
  %v560 = vmul.f32 %v549, %v105
  %v561 = vmul.f32 %v550, %v106
  %v562 = vmul.f32 %v551, %v107
  %v563 = vmul.f32 %v558, %v108
  %v564 = vld [vmem:[%s5] sm:$0xff]
  %v565 = vld [vmem:[%s6] sm:$0xff]
  %567 = vset.pattern.permute.xlu0 0
  %568 = vperm.xlu0 %567, %v565
  %v569 = vpop.permute.xlu0 %568
  %v572 = vsel %vm204, %v564, 0
  %574 = vmatpush.msra.mxu0 0.0
  %575 = vmatpush.msra.mxu0 0.0
  %576 = vmatpush.msra.mxu0 0.0
  %577 = vmatpush.msra.mxu0 0.0
  %578 = vmatpush.msra.mxu0 0.0
  %579 = vmatpush.msra.mxu0 0.0
  %580 = vmatpush.msra.mxu0 0.0
  %581 = vmatpush.msra.mxu0 0.0
  %582 = vmatpush.msra.mxu0 0.0
  %583 = vmatpush.msra.mxu0 0.0
  %584 = vmatpush.msra.mxu0 %v559
  %585 = vmatpush.msra.mxu0 %v527
  %586 = vmatpush.msra.mxu0 %v512
  %587 = vmatpush.msra.mxu0 %v486
  %588 = vmatpush.msra.mxu0 %v429
  %589 = vmatpush.msra.mxu0 %v460
  %590 = vmatmul.f32.gmra.mxu0 %v572
  %v591 = vpop.f32.mrf.mxu0
  %v592 = vadd.f32 %v569, %v591
  %593 = vdwg.mxu0
  %594 = vmatpush.msra.mxu0 0.0
  %595 = vmatpush.msra.mxu0 0.0
  %596 = vmatpush.msra.mxu0 0.0
  %597 = vmatpush.msra.mxu0 0.0
  %598 = vmatpush.msra.mxu0 0.0
  %599 = vmatpush.msra.mxu0 0.0
  %600 = vmatpush.msra.mxu0 0.0
  %601 = vmatpush.msra.mxu0 0.0
  %602 = vmatpush.msra.mxu0 0.0
  %603 = vmatpush.msra.mxu0 0.0
  %604 = vmatpush.msra.mxu0 %v560
  %605 = vmatpush.msra.mxu0 %v528
  %606 = vmatpush.msra.mxu0 %v513
  %607 = vmatpush.msra.mxu0 %v487
  %608 = vmatpush.msra.mxu0 %v430
  %609 = vmatpush.msra.mxu0 %v461
  %610 = vmatmul.f32.gmra.mxu0 %v572
  %v611 = vpop.f32.mrf.mxu0
  %v612 = vadd.f32 %v569, %v611
  %613 = vdwg.mxu0
  %614 = vmatpush.msra.mxu0 0.0
  %615 = vmatpush.msra.mxu0 0.0
  %616 = vmatpush.msra.mxu0 0.0
  %617 = vmatpush.msra.mxu0 0.0
  %618 = vmatpush.msra.mxu0 0.0
  %619 = vmatpush.msra.mxu0 0.0
  %620 = vmatpush.msra.mxu0 0.0
  %621 = vmatpush.msra.mxu0 0.0
  %622 = vmatpush.msra.mxu0 0.0
  %623 = vmatpush.msra.mxu0 0.0
  %624 = vmatpush.msra.mxu0 %v561
  %625 = vmatpush.msra.mxu0 %v529
  %626 = vmatpush.msra.mxu0 %v514
  %627 = vmatpush.msra.mxu0 %v488
  %628 = vmatpush.msra.mxu0 %v431
  %629 = vmatpush.msra.mxu0 %v462
  %630 = vmatmul.f32.gmra.mxu0 %v572
  %v631 = vpop.f32.mrf.mxu0
  %v632 = vadd.f32 %v569, %v631
  %633 = vdwg.mxu0
  %634 = vmatpush.msra.mxu0 0.0
  %635 = vmatpush.msra.mxu0 0.0
  %636 = vmatpush.msra.mxu0 0.0
  %637 = vmatpush.msra.mxu0 0.0
  %638 = vmatpush.msra.mxu0 0.0
  %639 = vmatpush.msra.mxu0 0.0
  %640 = vmatpush.msra.mxu0 0.0
  %641 = vmatpush.msra.mxu0 0.0
  %642 = vmatpush.msra.mxu0 0.0
  %643 = vmatpush.msra.mxu0 0.0
  %644 = vmatpush.msra.mxu0 %v562
  %645 = vmatpush.msra.mxu0 %v530
  %646 = vmatpush.msra.mxu0 %v515
  %647 = vmatpush.msra.mxu0 %v489
  %648 = vmatpush.msra.mxu0 %v432
  %649 = vmatpush.msra.mxu0 %v463
  %650 = vmatmul.f32.gmra.mxu0 %v572
  %v651 = vpop.f32.mrf.mxu0
  %v652 = vadd.f32 %v569, %v651
  %653 = vdwg.mxu0
  %654 = vmatpush.msra.mxu0 0.0
  %655 = vmatpush.msra.mxu0 0.0
  %656 = vmatpush.msra.mxu0 0.0
  %657 = vmatpush.msra.mxu0 0.0
  %658 = vmatpush.msra.mxu0 0.0
  %659 = vmatpush.msra.mxu0 0.0
  %660 = vmatpush.msra.mxu0 0.0
  %661 = vmatpush.msra.mxu0 0.0
  %662 = vmatpush.msra.mxu0 0.0
  %663 = vmatpush.msra.mxu0 0.0
  %664 = vmatpush.msra.mxu0 %v563
  %665 = vmatpush.msra.mxu0 %v537
  %666 = vmatpush.msra.mxu0 %v516
  %667 = vmatpush.msra.mxu0 %v490
  %668 = vmatpush.msra.mxu0 %v433
  %669 = vmatpush.msra.mxu0 %v464
  %670 = vmatmul.f32.gmra.mxu0 %v572
  %v671 = vpop.f32.mrf.mxu0
  %v672 = vadd.f32 %v569, %v671
  %673 = vdwg.mxu0
  %v674 = vadd.f32 %v592, %v232
  %v675 = vadd.f32 %v612, %v255
  %v676 = vadd.f32 %v632, %v278
  %v677 = vadd.f32 %v652, %v301
  %v678 = vadd.f32 %v672, %v324
  %680 = vrot.lane.b32.xlu0 %v678, 1
  %v681 = vpop.permute.xlu0 %680
  %687 = vrot.lane.b32.xlu0 %v674, 1
  %v688 = vpop.permute.xlu0 %687
  %689 = vrot.lane.b32.xlu0 %v675, 1
  %v690 = vpop.permute.xlu0 %689
  %691 = vrot.lane.b32.xlu0 %v676, 1
  %v692 = vpop.permute.xlu0 %691
  %693 = vrot.lane.b32.xlu0 %v677, 1
  %v694 = vpop.permute.xlu0 %693
  %v695 = vsel %vm61, %v688, %v690
  %v696 = vsel %vm61, %v690, %v692
  %v697 = vsel %vm61, %v692, %v694
  %v698 = vsel %vm61, %v694, %v681
  %v704 = vsel %vm61, %v681, %v688
  %v705 = vmul.f32 %v704, %v72
  %v706 = vmul.f32 %v695, %v73
  %v707 = vmul.f32 %v696, %v74
  %v708 = vmul.f32 %v697, %v75
  %v709 = vmul.f32 %v698, %v76
  %710 = vrot.lane.b32.xlu0 %v674, 127
  %v711 = vpop.permute.xlu0 %710
  %712 = vrot.lane.b32.xlu0 %v675, 127
  %v713 = vpop.permute.xlu0 %712
  %714 = vrot.lane.b32.xlu0 %v676, 127
  %v715 = vpop.permute.xlu0 %714
  %716 = vrot.lane.b32.xlu0 %v677, 127
  %v717 = vpop.permute.xlu0 %716
  %718 = vrot.lane.b32.xlu0 %v678, 127
  %v719 = vpop.permute.xlu0 %718
  %v720 = vsel %vm92, %v711, %v713
  %v721 = vsel %vm92, %v713, %v715
  %v722 = vsel %vm92, %v715, %v717
  %v723 = vsel %vm92, %v717, %v719
  %v730 = vsel %vm92, %v719, %v711
  %v731 = vmul.f32 %v720, %v104
  %v732 = vmul.f32 %v721, %v105
  %v733 = vmul.f32 %v722, %v106
  %v734 = vmul.f32 %v723, %v107
  %v735 = vmul.f32 %v730, %v108
  %736 = vrot.lane.b32.xlu0 %v674, 126
  %v737 = vpop.permute.xlu0 %736
  %738 = vrot.lane.b32.xlu0 %v675, 126
  %v739 = vpop.permute.xlu0 %738
  %740 = vrot.lane.b32.xlu0 %v676, 126
  %v741 = vpop.permute.xlu0 %740
  %742 = vrot.lane.b32.xlu0 %v677, 126
  %v743 = vpop.permute.xlu0 %742
  %744 = vrot.lane.b32.xlu0 %v678, 126
  %v745 = vpop.permute.xlu0 %744
  %vm746 = vcmask 1031168
  %v747 = vsel %vm746, %v737, %v739
  %v748 = vsel %vm746, %v739, %v741
  %v749 = vsel %vm746, %v741, %v743
  %v750 = vsel %vm746, %v743, %v745
  %v757 = vsel %vm746, %v745, %v737
  %v758 = vperm.slane %v35, 2
  %v759 = vperm.slane %v36, 2
  %v760 = vperm.slane %v37, 2
  %v761 = vperm.slane %v38, 2
  %v762 = vperm.slane %v39, 2
  %v763 = vmul.f32 %v747, %v758
  %v764 = vmul.f32 %v748, %v759
  %v765 = vmul.f32 %v749, %v760
  %v766 = vmul.f32 %v750, %v761
  %v767 = vmul.f32 %v757, %v762
  %768 = vrot.lane.b32.xlu0 %v674, 125
  %v769 = vpop.permute.xlu0 %768
  %770 = vrot.lane.b32.xlu0 %v675, 125
  %v771 = vpop.permute.xlu0 %770
  %772 = vrot.lane.b32.xlu0 %v676, 125
  %v773 = vpop.permute.xlu0 %772
  %774 = vrot.lane.b32.xlu0 %v677, 125
  %v775 = vpop.permute.xlu0 %774
  %776 = vrot.lane.b32.xlu0 %v678, 125
  %v777 = vpop.permute.xlu0 %776
  %vm778 = vcmask 1022976
  %v779 = vsel %vm778, %v769, %v771
  %v780 = vsel %vm778, %v771, %v773
  %v781 = vsel %vm778, %v773, %v775
  %v782 = vsel %vm778, %v775, %v777
  %v789 = vsel %vm778, %v777, %v769
  %v790 = vperm.slane %v35, 3
  %v791 = vperm.slane %v36, 3
  %v792 = vperm.slane %v37, 3
  %v793 = vperm.slane %v38, 3
  %v794 = vperm.slane %v39, 3
  %v795 = vmul.f32 %v779, %v790
  %v796 = vmul.f32 %v780, %v791
  %v797 = vmul.f32 %v781, %v792
  %v798 = vmul.f32 %v782, %v793
  %v799 = vmul.f32 %v789, %v794
  %v800 = vld [vmem:[%s7] sm:$0xff]
  %v801 = vld [vmem:[%s8] sm:$0xff]
  %803 = vset.pattern.permute.xlu0 0
  %804 = vperm.xlu0 %803, %v801
  %v805 = vpop.permute.xlu0 %804
  %vm807 = vcmask 326656
  %v809 = vsel %vm807, %v800, 0
  %811 = vmatpush.msra.mxu0 0.0
  %812 = vmatpush.msra.mxu0 0.0
  %813 = vmatpush.msra.mxu0 0.0
  %814 = vmatpush.msra.mxu0 0.0
  %815 = vmatpush.msra.mxu0 0.0
  %816 = vmatpush.msra.mxu0 0.0
  %817 = vmatpush.msra.mxu0 0.0
  %818 = vmatpush.msra.mxu0 0.0
  %819 = vmatpush.msra.mxu0 0.0
  %820 = vmatpush.msra.mxu0 0.0
  %821 = vmatpush.msra.mxu0 0.0
  %822 = vmatpush.msra.mxu0 %v795
  %823 = vmatpush.msra.mxu0 %v763
  %824 = vmatpush.msra.mxu0 %v731
  %825 = vmatpush.msra.mxu0 %v674
  %826 = vmatpush.msra.mxu0 %v705
  %827 = vmatmul.f32.gmra.mxu0 %v809
  %v828 = vpop.f32.mrf.mxu0
  %v829 = vadd.f32 %v805, %v828
  %830 = vdwg.mxu0
  %831 = vmatpush.msra.mxu0 0.0
  %832 = vmatpush.msra.mxu0 0.0
  %833 = vmatpush.msra.mxu0 0.0
  %834 = vmatpush.msra.mxu0 0.0
  %835 = vmatpush.msra.mxu0 0.0
  %836 = vmatpush.msra.mxu0 0.0
  %837 = vmatpush.msra.mxu0 0.0
  %838 = vmatpush.msra.mxu0 0.0
  %839 = vmatpush.msra.mxu0 0.0
  %840 = vmatpush.msra.mxu0 0.0
  %841 = vmatpush.msra.mxu0 0.0
  %842 = vmatpush.msra.mxu0 %v796
  %843 = vmatpush.msra.mxu0 %v764
  %844 = vmatpush.msra.mxu0 %v732
  %845 = vmatpush.msra.mxu0 %v675
  %846 = vmatpush.msra.mxu0 %v706
  %847 = vmatmul.f32.gmra.mxu0 %v809
  %v848 = vpop.f32.mrf.mxu0
  %v849 = vadd.f32 %v805, %v848
  %850 = vdwg.mxu0
  %851 = vmatpush.msra.mxu0 0.0
  %852 = vmatpush.msra.mxu0 0.0
  %853 = vmatpush.msra.mxu0 0.0
  %854 = vmatpush.msra.mxu0 0.0
  %855 = vmatpush.msra.mxu0 0.0
  %856 = vmatpush.msra.mxu0 0.0
  %857 = vmatpush.msra.mxu0 0.0
  %858 = vmatpush.msra.mxu0 0.0
  %859 = vmatpush.msra.mxu0 0.0
  %860 = vmatpush.msra.mxu0 0.0
  %861 = vmatpush.msra.mxu0 0.0
  %862 = vmatpush.msra.mxu0 %v797
  %863 = vmatpush.msra.mxu0 %v765
  %864 = vmatpush.msra.mxu0 %v733
  %865 = vmatpush.msra.mxu0 %v676
  %866 = vmatpush.msra.mxu0 %v707
  %867 = vmatmul.f32.gmra.mxu0 %v809
  %v868 = vpop.f32.mrf.mxu0
  %v869 = vadd.f32 %v805, %v868
  %870 = vdwg.mxu0
  %871 = vmatpush.msra.mxu0 0.0
  %872 = vmatpush.msra.mxu0 0.0
  %873 = vmatpush.msra.mxu0 0.0
  %874 = vmatpush.msra.mxu0 0.0
  %875 = vmatpush.msra.mxu0 0.0
  %876 = vmatpush.msra.mxu0 0.0
  %877 = vmatpush.msra.mxu0 0.0
  %878 = vmatpush.msra.mxu0 0.0
  %879 = vmatpush.msra.mxu0 0.0
  %880 = vmatpush.msra.mxu0 0.0
  %881 = vmatpush.msra.mxu0 0.0
  %882 = vmatpush.msra.mxu0 %v798
  %883 = vmatpush.msra.mxu0 %v766
  %884 = vmatpush.msra.mxu0 %v734
  %885 = vmatpush.msra.mxu0 %v677
  %886 = vmatpush.msra.mxu0 %v708
  %887 = vmatmul.f32.gmra.mxu0 %v809
  %v888 = vpop.f32.mrf.mxu0
  %v889 = vadd.f32 %v805, %v888
  %890 = vdwg.mxu0
  %891 = vmatpush.msra.mxu0 0.0
  %892 = vmatpush.msra.mxu0 0.0
  %893 = vmatpush.msra.mxu0 0.0
  %894 = vmatpush.msra.mxu0 0.0
  %895 = vmatpush.msra.mxu0 0.0
  %896 = vmatpush.msra.mxu0 0.0
  %897 = vmatpush.msra.mxu0 0.0
  %898 = vmatpush.msra.mxu0 0.0
  %899 = vmatpush.msra.mxu0 0.0
  %900 = vmatpush.msra.mxu0 0.0
  %901 = vmatpush.msra.mxu0 0.0
  %902 = vmatpush.msra.mxu0 %v799
  %903 = vmatpush.msra.mxu0 %v767
  %904 = vmatpush.msra.mxu0 %v735
  %905 = vmatpush.msra.mxu0 %v678
  %906 = vmatpush.msra.mxu0 %v709
  %907 = vmatmul.f32.gmra.mxu0 %v809
  %v908 = vpop.f32.mrf.mxu0
  %v909 = vadd.f32 %v805, %v908
  %910 = vdwg.mxu0
  %911 = vst [vmem:[%s10] sm:$0xff] %v829
  %912 = vst [vmem:[%s10 + $0x8] sm:$0xff] %v849
  %913 = vst [vmem:[%s10 + $0x10] sm:$0xff] %v869
  %914 = vst [vmem:[%s10 + $0x18] sm:$0xff] %v889
  %915 = vst [vmem:[%s10 + $0x20] sm:$0xff] %v909
  // Predicated region
  $region42: #{_forward_jit.1} parent=0 // pred_check
    _
  $region43: #{_forward_jit.1} parent=0 // pred_check_branch
    %917 = sbr.rel (0) target = $region45
  $region44: #{_forward_jit.1} parent=0 // pred_region
    _
  $region45: #{_forward_jit.1} parent=0 // pred_fallthru
    _
  // Predicated region
  $region46: #{_forward_jit.1} parent=0 // pred_check
    _
  $region47: #{_forward_jit.1} parent=0 // pred_check_branch
    %919 = sbr.rel (0) target = $region49
  $region48: #{_forward_jit.1} parent=0 // pred_region
    _
  $region49: #{_forward_jit.1} parent=0 // pred_fallthru
    _

</llo_original>
